<compile_context>
chip_gen: v5e
topology: v5e:2x2
jax: 0.10.0
libtpu: 0.0.40
codegen_flags: <defaults>
</compile_context>

<pallas_src>
import jax
import jax.numpy as jnp
from jax.experimental import pallas as pl
from jax.experimental.pallas import tpu as pltpu


def _expression_mlp_kernel(x_ref, w1_ref, b1_ref, w2_ref, b2_ref, out_ref):
    # x_ref : (TILE_N, C*HW)  streamed activation tile (auto double-buffered)
    # w1_ref: (C*HW, HID)     pool(1/HW) + fc1 folded weight, VMEM-resident
    # b1_ref: (1, HID)        fc1 bias (f32)
    # w2_ref: (HID, K)        fc2 weight, VMEM-resident
    # b2_ref: (1, K)          fc2 bias (f32)
    # out_ref: (TILE_N, K)
    #
    # AdaptiveAvgPool2d(1) + Flatten + fc1 in a single MXU matmul: the spatial
    # reduction and the 1/HW scale live inside w1_ref, so there is no XLU
    # cross-lane reduction in the kernel at all.
    h = jnp.dot(x_ref[...], w1_ref[...], preferred_element_type=jnp.float32)
    h = jnp.maximum(h + b1_ref[...], 0.0)                       # fc1 + ReLU
    o = jnp.dot(h.astype(w2_ref.dtype), w2_ref[...],
                preferred_element_type=jnp.float32)             # fc2
    out_ref[...] = (o + b2_ref[...]).astype(out_ref.dtype)


def expression_mlp_forward(x_nchw, w1, b1, w2, b2, *, tile_n=None):
    """x_nchw: (N, C, H, W). w1:(C,hid) b1:(hid,) w2:(hid,K) b2:(K,).
    Returns (N, K) float32."""
    N, C, H, W = x_nchw.shape
    HW = H * W
    CHW = C * HW
    hidden = w1.shape[-1]
    num_classes = w2.shape[-1]
    cdtype = x_nchw.dtype          # MXU operand dtype follows the activations

    # (N, C, H, W) -> (N, C*HW): contiguous row-major flatten, no copy.
    x_flat = x_nchw.reshape(N, CHW)

    # Per-generation tile selection: largest activation tile that
    # double-buffers comfortably in VMEM.
    if tile_n is None:
        vmem_cap = 64 * 1024 * 1024
        try:
            vmem_cap = int(getattr(pltpu.get_tpu_info(),
                                   "vmem_capacity_bytes", vmem_cap))
        except Exception:
            pass
        if vmem_cap >= 100 * 1024 * 1024:        # v5e / v6e: 128 MiB VMEM
            tile_n, vmem_limit = 512, 96 * 1024 * 1024
        else:                                     # v7x (64 MiB/TC) or unknown
            tile_n, vmem_limit = 256, 48 * 1024 * 1024
    else:
        vmem_limit = 48 * 1024 * 1024

    if tile_n >= N:
        tile_n = N                                # single full-batch tile
    else:
        tile_n = max(8, (tile_n // 8) * 8)        # sublane-aligned batch tile

    # No host-side padding of x: partial boundary block is masked by Pallas
    # (output rows >= N are never written back; padded input rows only feed
    # output rows that are discarded).
    grid = (pl.cdiv(N, tile_n),)

    # Fold AdaptiveAvgPool2d(1) (spatial mean) + fc1 into one (C*HW, hidden)
    # weight: row c*HW + s of w1_big is w1[c] / HW. Tiny & static -> resident.
    w1_big = jnp.repeat(w1.astype(jnp.float32) / float(HW), HW,
                        axis=0).astype(cdtype)
    w2_c = w2.astype(cdtype)
    b1_2d = b1.reshape(1, hidden).astype(jnp.float32)
    b2_2d = b2.reshape(1, num_classes).astype(jnp.float32)

    # Advisory cost: HBM-bound on the activation stream.
    itemsize = x_flat.dtype.itemsize
    bytes_accessed = (N * CHW * itemsize
                      + CHW * hidden * w1_big.dtype.itemsize
                      + hidden * num_classes * w2_c.dtype.itemsize
                      + (hidden + num_classes) * 4
                      + N * num_classes * 4)
    flops = 2 * N * (CHW * hidden + hidden * num_classes)

    return pl.pallas_call(
        _expression_mlp_kernel,
        out_shape=jax.ShapeDtypeStruct((N, num_classes), jnp.float32),
        grid=grid,
        in_specs=[
            pl.BlockSpec((tile_n, CHW), lambda i: (i, 0)),           # streamed
            pl.BlockSpec((CHW, hidden), lambda i: (0, 0)),           # resident
            pl.BlockSpec((1, hidden), lambda i: (0, 0)),             # resident
            pl.BlockSpec((hidden, num_classes), lambda i: (0, 0)),   # resident
            pl.BlockSpec((1, num_classes), lambda i: (0, 0)),        # resident
        ],
        out_specs=pl.BlockSpec((tile_n, num_classes), lambda i: (i, 0)),
        compiler_params=pltpu.CompilerParams(
            dimension_semantics=("parallel",),      # megacore on v7x
            vmem_limit_bytes=vmem_limit,
        ),
        cost_estimate=pl.CostEstimate(
            flops=flops, transcendentals=0, bytes_accessed=bytes_accessed),
    )(x_flat, w1_big, b1_2d, w2_c, b2_2d)


def init_params(key, in_channels, hidden=32, num_classes=8):
    # Deterministic init mimicking PyTorch Linear uniform(-1/sqrt(fan_in), ...)
    k1, k2, k3, k4 = jax.random.split(key, 4)
    lim1 = 1.0 / jnp.sqrt(in_channels)
    lim2 = 1.0 / jnp.sqrt(hidden)
    w1 = jax.random.uniform(k1, (in_channels, hidden), jnp.float32, -lim1, lim1)
    b1 = jax.random.uniform(k2, (hidden,), jnp.float32, -lim1, lim1)
    w2 = jax.random.uniform(k3, (hidden, num_classes), jnp.float32, -lim2, lim2)
    b2 = jax.random.uniform(k4, (num_classes,), jnp.float32, -lim2, lim2)
    return w1, b1, w2, b2


if __name__ == "__main__":
    key = jax.random.PRNGKey(0)
    kx, kp, kx2 = jax.random.split(key, 3)

    # Small shapes consistent with the module (Linear(in_channels, hidden)).
    N, C, H, W = 2, 4, 16, 16
    hidden, num_classes = 32, 8

    x = jax.random.normal(kx, (N, C, H, W), jnp.float32)
    w1, b1, w2, b2 = init_params(kp, C, hidden, num_classes)

    def reference(xin):
        pooled = xin.mean(axis=(2, 3))                    # AdaptiveAvgPool2d(1)
        h = jnp.maximum(pooled @ w1 + b1, 0.0)            # fc1 + ReLU
        return h @ w2 + b2                                # fc2

    # Single-tile path.
    out = jax.block_until_ready(expression_mlp_forward(x, w1, b1, w2, b2))
    ref = reference(x)
    assert out.shape == (N, num_classes)
    assert jnp.allclose(out, ref, atol=1e-4, rtol=1e-4)

    # Multi-tile + remainder path (N not a multiple of tile_n, no padding).
    N2 = 20
    x2 = jax.random.normal(kx2, (N2, C, H, W), jnp.float32)
    out2 = jax.block_until_ready(
        expression_mlp_forward(x2, w1, b1, w2, b2, tile_n=8))
    ref2 = reference(x2)
    assert out2.shape == (N2, num_classes)
    assert jnp.allclose(out2, ref2, atol=1e-4, rtol=1e-4)

    print("KERNEL_OK")
</pallas_src>

<mosaic_0001>
module attributes {stable_mosaic.version = 11 : i64} {
  func.func @_expression_mlp_kernel(%arg0: i32, %arg1: memref<2x1024xf32, #tpu.memory_space<vmem>>, %arg2: memref<1024x32xf32, #tpu.memory_space<vmem>>, %arg3: memref<1x32xf32, #tpu.memory_space<vmem>>, %arg4: memref<32x8xf32, #tpu.memory_space<vmem>>, %arg5: memref<1x8xf32, #tpu.memory_space<vmem>>, %arg6: memref<2x8xf32, #tpu.memory_space<vmem>>) attributes {dimension_semantics = [#tpu.dimension_semantics<parallel>], iteration_bounds = array<i64: 1>, scalar_prefetch = 0 : i64, scratch_operands = 0 : i64, tpu.core_type = #tpu.core_type<tc>, window_params = [{transform_indices = @transform_0, window_bounds = array<i64: 2, 1024>}, {pipeline_mode = #tpu.pipeline_mode<synchronous>, transform_indices = @transform_1, window_bounds = array<i64: 1024, 32>}, {pipeline_mode = #tpu.pipeline_mode<synchronous>, transform_indices = @transform_2, window_bounds = array<i64: 1, 32>}, {pipeline_mode = #tpu.pipeline_mode<synchronous>, transform_indices = @transform_3, window_bounds = array<i64: 32, 8>}, {pipeline_mode = #tpu.pipeline_mode<synchronous>, transform_indices = @transform_4, window_bounds = array<i64: 1, 8>}, {transform_indices = @transform_5, window_bounds = array<i64: 2, 8>}]} {
    %c0 = arith.constant 0 : index
    %c0_0 = arith.constant 0 : index
    %0 = vector.load %arg1[%c0, %c0_0] : memref<2x1024xf32, #tpu.memory_space<vmem>>, vector<2x1024xf32>
    %c0_1 = arith.constant 0 : index
    %c0_2 = arith.constant 0 : index
    %1 = vector.load %arg2[%c0_1, %c0_2] : memref<1024x32xf32, #tpu.memory_space<vmem>>, vector<1024x32xf32>
    %cst = arith.constant dense<0.000000e+00> : vector<2x32xf32>
    %2 = tpu.matmul %0, %1, %cst {dimension_numbers = #tpu.dot_dimension_numbers<[1], [0], [0], [1], [0, 0, 1, 1], [], []>} : vector<2x1024xf32>, vector<1024x32xf32>, vector<2x32xf32> -> vector<2x32xf32>
    %c0_3 = arith.constant 0 : index
    %c0_4 = arith.constant 0 : index
    %3 = vector.load %arg3[%c0_3, %c0_4] : memref<1x32xf32, #tpu.memory_space<vmem>>, vector<1x32xf32>
    %4 = vector.broadcast %3 : vector<1x32xf32> to vector<2x32xf32>
    %5 = arith.addf %2, %4 : vector<2x32xf32>
    %cst_5 = arith.constant 0.000000e+00 : f32
    %6 = vector.broadcast %cst_5 : f32 to vector<2x32xf32>
    %7 = arith.maximumf %5, %6 : vector<2x32xf32>
    %c0_6 = arith.constant 0 : index
    %c0_7 = arith.constant 0 : index
    %8 = vector.load %arg4[%c0_6, %c0_7] : memref<32x8xf32, #tpu.memory_space<vmem>>, vector<32x8xf32>
    %cst_8 = arith.constant dense<0.000000e+00> : vector<2x8xf32>
    %9 = tpu.matmul %7, %8, %cst_8 {dimension_numbers = #tpu.dot_dimension_numbers<[1], [0], [0], [1], [0, 0, 1, 1], [], []>} : vector<2x32xf32>, vector<32x8xf32>, vector<2x8xf32> -> vector<2x8xf32>
    %c0_9 = arith.constant 0 : index
    %c0_10 = arith.constant 0 : index
    %10 = vector.load %arg5[%c0_9, %c0_10] : memref<1x8xf32, #tpu.memory_space<vmem>>, vector<1x8xf32>
    %11 = vector.broadcast %10 : vector<1x8xf32> to vector<2x8xf32>
    %12 = arith.addf %9, %11 : vector<2x8xf32>
    %c0_11 = arith.constant 0 : index
    %c0_12 = arith.constant 0 : index
    %13 = vector.load %arg6[%c0_11, %c0_12] : memref<2x8xf32, #tpu.memory_space<vmem>>, vector<2x8xf32>
    tpu.vector_store %arg6[%c0_11, %c0_12], %12 {strides = array<i32>} : memref<2x8xf32, #tpu.memory_space<vmem>>, vector<2x8xf32>,
    return
  }
  func.func @transform_0(%arg0: i32) -> (i32, i32) {
    %c0_i32 = arith.constant 0 : i32
    %c0_i32_0 = arith.constant 0 : i32
    return %arg0, %c0_i32 : i32, i32
  }
  func.func @transform_1(%arg0: i32) -> (i32, i32) {
    %c0_i32 = arith.constant 0 : i32
    %c0_i32_0 = arith.constant 0 : i32
    %c0_i32_1 = arith.constant 0 : i32
    return %c0_i32, %c0_i32_0 : i32, i32
  }
  func.func @transform_2(%arg0: i32) -> (i32, i32) {
    %c0_i32 = arith.constant 0 : i32
    %c0_i32_0 = arith.constant 0 : i32
    %c0_i32_1 = arith.constant 0 : i32
    return %c0_i32, %c0_i32_0 : i32, i32
  }
  func.func @transform_3(%arg0: i32) -> (i32, i32) {
    %c0_i32 = arith.constant 0 : i32
    %c0_i32_0 = arith.constant 0 : i32
    %c0_i32_1 = arith.constant 0 : i32
    return %c0_i32, %c0_i32_0 : i32, i32
  }
  func.func @transform_4(%arg0: i32) -> (i32, i32) {
    %c0_i32 = arith.constant 0 : i32
    %c0_i32_0 = arith.constant 0 : i32
    %c0_i32_1 = arith.constant 0 : i32
    return %c0_i32, %c0_i32_0 : i32, i32
  }
  func.func @transform_5(%arg0: i32) -> (i32, i32) {
    %c0_i32 = arith.constant 0 : i32
    %c0_i32_0 = arith.constant 0 : i32
    return %arg0, %c0_i32 : i32, i32
  }
}

</mosaic_0001>

<llo_original>
// kernel: tpu_custom_call.1
$region0: #{tpu_custom_call.1}
  #allocation0 [shape = 'u32[]', space=smem, size = 0x4, offset = 0x4, fixed_abs, tag = 'smem constant byte address 0x4 - core index']
  #allocation1 [shape = 'u32[72,128]{1,0:T(1,128)}', space=vmem, size = 0x9000, scoped, tag = 'internal scratch']
  %s0 = inlined_call_operand.vmem [shape: f32[2,1024], index: 0, kind: input, shape index: {}]
  %s1 = inlined_call_operand.vmem [shape: f32[1024,32], index: 1, kind: input, shape index: {}]
  %s2 = inlined_call_operand.vmem [shape: f32[1,32], index: 2, kind: input, shape index: {}]
  %s3 = inlined_call_operand.vmem [shape: f32[32,8], index: 3, kind: input, shape index: {}]
  %s4 = inlined_call_operand.vmem [shape: f32[1,8], index: 4, kind: input, shape index: {}]
  %s5 = inlined_call_operand.hbm [shape: f32[2,8], index: 5, kind: output, shape index: {}]
  %s6 = sld [smem:[#allocation0]]
  $region30: #{tpu_custom_call.1} parent=0
    _
  %s8 = ssub.s32 1, %s6
  %s9 = scalar_select 0, %s8, %s6
  $region1: #{tpu_custom_call.1} parent=0
    #allocation2 [shape = 'u8[1024]{0}', space=vmem, size = 0x400, scoped, tag = 'output window, operand 0, single buffered']
    #allocation3 [shape = 's32[1]{0}', space=sflag, size = 0x4, scoped, tag = 'scoped memory for tpu_custom_call.1']
    %10 = vsyncpa [#allocation3], 0
    // Predicated region
    $region2: #{tpu_custom_call.1} parent=1 // pred_check
      _
    $region3: #{tpu_custom_call.1} parent=1 // pred_check_branch
      %12 = sbr.rel (0) target = $region5
    $region4: #{tpu_custom_call.1} parent=1 // pred_region
      _
    $region5: #{tpu_custom_call.1} parent=1 // pred_fallthru
      _
    // Predicated region
    $region6: #{tpu_custom_call.1} parent=1 // pred_check
      _
    $region7: #{tpu_custom_call.1} parent=1 // pred_check_branch
      %14 = sbr.rel (0) target = $region9
    $region8: #{tpu_custom_call.1} parent=1 // pred_region
      _
    $region9: #{tpu_custom_call.1} parent=1 // pred_fallthru
      _
    // Predicated region
    $region10: #{tpu_custom_call.1} parent=1 // pred_check
      _
    $region11: #{tpu_custom_call.1} parent=1 // pred_check_branch
      %16 = sbr.rel (0) target = $region13
    $region12: #{tpu_custom_call.1} parent=1 // pred_region
      _
    $region13: #{tpu_custom_call.1} parent=1 // pred_fallthru
      _
    // Predicated region
    $region14: #{tpu_custom_call.1} parent=1 // pred_check
      _
    $region15: #{tpu_custom_call.1} parent=1 // pred_check_branch
      %18 = sbr.rel (0) target = $region17
    $region16: #{tpu_custom_call.1} parent=1 // pred_region
      _
    $region17: #{tpu_custom_call.1} parent=1 // pred_fallthru
      _
    // Predicated region
    $region18: #{tpu_custom_call.1} parent=1 // pred_check
      _
    $region19: #{tpu_custom_call.1} parent=1 // pred_check_branch
      %20 = sbr.rel (0) target = $region21
    $region20: #{tpu_custom_call.1} parent=1 // pred_region
      _
    $region21: #{tpu_custom_call.1} parent=1 // pred_fallthru
      _
    %v21 = vld [vmem:[%s0] sm:$0xff]
    %v22 = vld [vmem:[%s0 + $0x8] sm:$0xff]
    %v23 = vld [vmem:[%s1] sm:$0xff]
    %v24 = vld [vmem:[%s1 + $0x8] sm:$0xff]
    %v25 = vld [vmem:[%s1 + $0x10] sm:$0xff]
    %v26 = vld [vmem:[%s1 + $0x18] sm:$0xff]
    %v27 = vld [vmem:[%s1 + $0x20] sm:$0xff]
    %v28 = vld [vmem:[%s1 + $0x28] sm:$0xff]
    %v29 = vld [vmem:[%s1 + $0x30] sm:$0xff]
    %v30 = vld [vmem:[%s1 + $0x38] sm:$0xff]
    %v31 = vld [vmem:[%s1 + $0x40] sm:$0xff]
    %v32 = vld [vmem:[%s1 + $0x48] sm:$0xff]
    %v33 = vld [vmem:[%s1 + $0x50] sm:$0xff]
    %v34 = vld [vmem:[%s1 + $0x58] sm:$0xff]
    %v35 = vld [vmem:[%s1 + $0x60] sm:$0xff]
    %v36 = vld [vmem:[%s1 + $0x68] sm:$0xff]
    %v37 = vld [vmem:[%s1 + $0x70] sm:$0xff]
    %v38 = vld [vmem:[%s1 + $0x78] sm:$0xff]
    %v39 = vld [vmem:[%s1 + $0x80] sm:$0xff]
    %v40 = vld [vmem:[%s1 + $0x88] sm:$0xff]
    %v41 = vld [vmem:[%s1 + $0x90] sm:$0xff]
    %v42 = vld [vmem:[%s1 + $0x98] sm:$0xff]
    %v43 = vld [vmem:[%s1 + $0xa0] sm:$0xff]
    %v44 = vld [vmem:[%s1 + $0xa8] sm:$0xff]
    %v45 = vld [vmem:[%s1 + $0xb0] sm:$0xff]
    %v46 = vld [vmem:[%s1 + $0xb8] sm:$0xff]
    %v47 = vld [vmem:[%s1 + $0xc0] sm:$0xff]
    %v48 = vld [vmem:[%s1 + $0xc8] sm:$0xff]
    %v49 = vld [vmem:[%s1 + $0xd0] sm:$0xff]
    %v50 = vld [vmem:[%s1 + $0xd8] sm:$0xff]
    %v51 = vld [vmem:[%s1 + $0xe0] sm:$0xff]
    %v52 = vld [vmem:[%s1 + $0xe8] sm:$0xff]
    %v53 = vld [vmem:[%s1 + $0xf0] sm:$0xff]
    %v54 = vld [vmem:[%s1 + $0xf8] sm:$0xff]
    %v55 = vld [vmem:[%s1 + $0x100] sm:$0xff]
    %v56 = vld [vmem:[%s1 + $0x108] sm:$0xff]
    %v57 = vld [vmem:[%s1 + $0x110] sm:$0xff]
    %v58 = vld [vmem:[%s1 + $0x118] sm:$0xff]
    %v59 = vld [vmem:[%s1 + $0x120] sm:$0xff]
    %v60 = vld [vmem:[%s1 + $0x128] sm:$0xff]
    %v61 = vld [vmem:[%s1 + $0x130] sm:$0xff]
    %v62 = vld [vmem:[%s1 + $0x138] sm:$0xff]
    %v63 = vld [vmem:[%s1 + $0x140] sm:$0xff]
    %v64 = vld [vmem:[%s1 + $0x148] sm:$0xff]
    %v65 = vld [vmem:[%s1 + $0x150] sm:$0xff]
    %v66 = vld [vmem:[%s1 + $0x158] sm:$0xff]
    %v67 = vld [vmem:[%s1 + $0x160] sm:$0xff]
    %v68 = vld [vmem:[%s1 + $0x168] sm:$0xff]
    %v69 = vld [vmem:[%s1 + $0x170] sm:$0xff]
    %v70 = vld [vmem:[%s1 + $0x178] sm:$0xff]
    %v71 = vld [vmem:[%s1 + $0x180] sm:$0xff]
    %v72 = vld [vmem:[%s1 + $0x188] sm:$0xff]
    %v73 = vld [vmem:[%s1 + $0x190] sm:$0xff]
    %v74 = vld [vmem:[%s1 + $0x198] sm:$0xff]
    %v75 = vld [vmem:[%s1 + $0x1a0] sm:$0xff]
    %v76 = vld [vmem:[%s1 + $0x1a8] sm:$0xff]
    %v77 = vld [vmem:[%s1 + $0x1b0] sm:$0xff]
    %v78 = vld [vmem:[%s1 + $0x1b8] sm:$0xff]
    %v79 = vld [vmem:[%s1 + $0x1c0] sm:$0xff]
    %v80 = vld [vmem:[%s1 + $0x1c8] sm:$0xff]
    %v81 = vld [vmem:[%s1 + $0x1d0] sm:$0xff]
    %v82 = vld [vmem:[%s1 + $0x1d8] sm:$0xff]
    %v83 = vld [vmem:[%s1 + $0x1e0] sm:$0xff]
    %v84 = vld [vmem:[%s1 + $0x1e8] sm:$0xff]
    %v85 = vld [vmem:[%s1 + $0x1f0] sm:$0xff]
    %v86 = vld [vmem:[%s1 + $0x1f8] sm:$0xff]
    %v87 = vld [vmem:[%s1 + $0x200] sm:$0xff]
    %v88 = vld [vmem:[%s1 + $0x208] sm:$0xff]
    %v89 = vld [vmem:[%s1 + $0x210] sm:$0xff]
    %v90 = vld [vmem:[%s1 + $0x218] sm:$0xff]
    %v91 = vld [vmem:[%s1 + $0x220] sm:$0xff]
    %v92 = vld [vmem:[%s1 + $0x228] sm:$0xff]
    %v93 = vld [vmem:[%s1 + $0x230] sm:$0xff]
    %v94 = vld [vmem:[%s1 + $0x238] sm:$0xff]
    %v95 = vld [vmem:[%s1 + $0x240] sm:$0xff]
    %v96 = vld [vmem:[%s1 + $0x248] sm:$0xff]
    %v97 = vld [vmem:[%s1 + $0x250] sm:$0xff]
    %v98 = vld [vmem:[%s1 + $0x258] sm:$0xff]
    %v99 = vld [vmem:[%s1 + $0x260] sm:$0xff]
    %v100 = vld [vmem:[%s1 + $0x268] sm:$0xff]
    %v101 = vld [vmem:[%s1 + $0x270] sm:$0xff]
    %v102 = vld [vmem:[%s1 + $0x278] sm:$0xff]
    %v103 = vld [vmem:[%s1 + $0x280] sm:$0xff]
    %v104 = vld [vmem:[%s1 + $0x288] sm:$0xff]
    %v105 = vld [vmem:[%s1 + $0x290] sm:$0xff]
    %v106 = vld [vmem:[%s1 + $0x298] sm:$0xff]
    %v107 = vld [vmem:[%s1 + $0x2a0] sm:$0xff]
    %v108 = vld [vmem:[%s1 + $0x2a8] sm:$0xff]
    %v109 = vld [vmem:[%s1 + $0x2b0] sm:$0xff]
    %v110 = vld [vmem:[%s1 + $0x2b8] sm:$0xff]
    %v111 = vld [vmem:[%s1 + $0x2c0] sm:$0xff]
    %v112 = vld [vmem:[%s1 + $0x2c8] sm:$0xff]
    %v113 = vld [vmem:[%s1 + $0x2d0] sm:$0xff]
    %v114 = vld [vmem:[%s1 + $0x2d8] sm:$0xff]
    %v115 = vld [vmem:[%s1 + $0x2e0] sm:$0xff]
    %v116 = vld [vmem:[%s1 + $0x2e8] sm:$0xff]
    %v117 = vld [vmem:[%s1 + $0x2f0] sm:$0xff]
    %v118 = vld [vmem:[%s1 + $0x2f8] sm:$0xff]
    %v119 = vld [vmem:[%s1 + $0x300] sm:$0xff]
    %v120 = vld [vmem:[%s1 + $0x308] sm:$0xff]
    %v121 = vld [vmem:[%s1 + $0x310] sm:$0xff]
    %v122 = vld [vmem:[%s1 + $0x318] sm:$0xff]
    %v123 = vld [vmem:[%s1 + $0x320] sm:$0xff]
    %v124 = vld [vmem:[%s1 + $0x328] sm:$0xff]
    %v125 = vld [vmem:[%s1 + $0x330] sm:$0xff]
    %v126 = vld [vmem:[%s1 + $0x338] sm:$0xff]
    %v127 = vld [vmem:[%s1 + $0x340] sm:$0xff]
    %v128 = vld [vmem:[%s1 + $0x348] sm:$0xff]
    %v129 = vld [vmem:[%s1 + $0x350] sm:$0xff]
    %v130 = vld [vmem:[%s1 + $0x358] sm:$0xff]
    %v131 = vld [vmem:[%s1 + $0x360] sm:$0xff]
    %v132 = vld [vmem:[%s1 + $0x368] sm:$0xff]
    %v133 = vld [vmem:[%s1 + $0x370] sm:$0xff]
    %v134 = vld [vmem:[%s1 + $0x378] sm:$0xff]
    %v135 = vld [vmem:[%s1 + $0x380] sm:$0xff]
    %v136 = vld [vmem:[%s1 + $0x388] sm:$0xff]
    %v137 = vld [vmem:[%s1 + $0x390] sm:$0xff]
    %v138 = vld [vmem:[%s1 + $0x398] sm:$0xff]
    %v139 = vld [vmem:[%s1 + $0x3a0] sm:$0xff]
    %v140 = vld [vmem:[%s1 + $0x3a8] sm:$0xff]
    %v141 = vld [vmem:[%s1 + $0x3b0] sm:$0xff]
    %v142 = vld [vmem:[%s1 + $0x3b8] sm:$0xff]
    %v143 = vld [vmem:[%s1 + $0x3c0] sm:$0xff]
    %v144 = vld [vmem:[%s1 + $0x3c8] sm:$0xff]
    %v145 = vld [vmem:[%s1 + $0x3d0] sm:$0xff]
    %v146 = vld [vmem:[%s1 + $0x3d8] sm:$0xff]
    %v147 = vld [vmem:[%s1 + $0x3e0] sm:$0xff]
    %v148 = vld [vmem:[%s1 + $0x3e8] sm:$0xff]
    %v149 = vld [vmem:[%s1 + $0x3f0] sm:$0xff]
    %v150 = vld [vmem:[%s1 + $0x3f8] sm:$0xff]
    %v151 = vld [vmem:[%s2] sm:$0x1]
    %v153 = vperm.slane %v151, 0
    %157 = vst [vmem:[#allocation1] ss:$4 sm:$0xff] %v21
    %s158 = scalar_lea.vmem [#allocation1], 32
    %159 = vst [vmem:[%s158] ss:$4 sm:$0xff] %v22
    %v160 = vld.sshfl [vmem:[#allocation1] sm:$0xff pattern:$0x73625140]
    %v161 = vld.sshfl [vmem:[#allocation1 + $0x8] sm:$0xff pattern:$0x73625140]
    %v162 = vld.sshfl [vmem:[#allocation1 + $0x10] sm:$0xff pattern:$0x73625140]
    %v163 = vld.sshfl [vmem:[#allocation1 + $0x18] sm:$0xff pattern:$0x73625140]
    %v164 = vld.sshfl [vmem:[#allocation1 + $0x20] sm:$0xff pattern:$0x73625140]
    %v165 = vld.sshfl [vmem:[#allocation1 + $0x28] sm:$0xff pattern:$0x73625140]
    %v166 = vld.sshfl [vmem:[#allocation1 + $0x30] sm:$0xff pattern:$0x73625140]
    %v167 = vld.sshfl [vmem:[#allocation1 + $0x38] sm:$0xff pattern:$0x73625140]
    %176 = vmatpush.msra.mxu0 %v38
    %177 = vmatpush.msra.mxu0 %v37
    %178 = vmatpush.msra.mxu0 %v36
    %179 = vmatpush.msra.mxu0 %v35
    %180 = vmatpush.msra.mxu0 %v34
    %181 = vmatpush.msra.mxu0 %v33
    %182 = vmatpush.msra.mxu0 %v32
    %183 = vmatpush.msra.mxu0 %v31
    %184 = vmatpush.msra.mxu0 %v30
    %185 = vmatpush.msra.mxu0 %v29
    %186 = vmatpush.msra.mxu0 %v28
    %187 = vmatpush.msra.mxu0 %v27
    %188 = vmatpush.msra.mxu0 %v26
    %189 = vmatpush.msra.mxu0 %v25
    %190 = vmatpush.msra.mxu0 %v24
    %191 = vmatpush.msra.mxu0 %v23
    %192 = vmatmul.f32.gmra.mxu0 %v160
    %v193 = vpop.f32.mrf.mxu0
    %v194 = vadd.f32 %v153, %v193
    %195 = vdwg.mxu0
    %196 = vmatpush.msra.mxu0 %v54
    %197 = vmatpush.msra.mxu0 %v53
    %198 = vmatpush.msra.mxu0 %v52
    %199 = vmatpush.msra.mxu0 %v51
    %200 = vmatpush.msra.mxu0 %v50
    %201 = vmatpush.msra.mxu0 %v49
    %202 = vmatpush.msra.mxu0 %v48
    %203 = vmatpush.msra.mxu0 %v47
    %204 = vmatpush.msra.mxu0 %v46
    %205 = vmatpush.msra.mxu0 %v45
    %206 = vmatpush.msra.mxu0 %v44
    %207 = vmatpush.msra.mxu0 %v43
    %208 = vmatpush.msra.mxu0 %v42
    %209 = vmatpush.msra.mxu0 %v41
    %210 = vmatpush.msra.mxu0 %v40
    %211 = vmatpush.msra.mxu0 %v39
    %212 = vmatmul.f32.gmra.mxu0 %v161
    %v213 = vpop.f32.mrf.mxu0
    %v214 = vadd.f32 %v194, %v213
    %215 = vdwg.mxu0
    %216 = vmatpush.msra.mxu0 %v70
    %217 = vmatpush.msra.mxu0 %v69
    %218 = vmatpush.msra.mxu0 %v68
    %219 = vmatpush.msra.mxu0 %v67
    %220 = vmatpush.msra.mxu0 %v66
    %221 = vmatpush.msra.mxu0 %v65
    %222 = vmatpush.msra.mxu0 %v64
    %223 = vmatpush.msra.mxu0 %v63
    %224 = vmatpush.msra.mxu0 %v62
    %225 = vmatpush.msra.mxu0 %v61
    %226 = vmatpush.msra.mxu0 %v60
    %227 = vmatpush.msra.mxu0 %v59
    %228 = vmatpush.msra.mxu0 %v58
    %229 = vmatpush.msra.mxu0 %v57
    %230 = vmatpush.msra.mxu0 %v56
    %231 = vmatpush.msra.mxu0 %v55
    %232 = vmatmul.f32.gmra.mxu0 %v162
    %v233 = vpop.f32.mrf.mxu0
    %v234 = vadd.f32 %v214, %v233
    %235 = vdwg.mxu0
    %236 = vmatpush.msra.mxu0 %v86
    %237 = vmatpush.msra.mxu0 %v85
    %238 = vmatpush.msra.mxu0 %v84
    %239 = vmatpush.msra.mxu0 %v83
    %240 = vmatpush.msra.mxu0 %v82
    %241 = vmatpush.msra.mxu0 %v81
    %242 = vmatpush.msra.mxu0 %v80
    %243 = vmatpush.msra.mxu0 %v79
    %244 = vmatpush.msra.mxu0 %v78
    %245 = vmatpush.msra.mxu0 %v77
    %246 = vmatpush.msra.mxu0 %v76
    %247 = vmatpush.msra.mxu0 %v75
    %248 = vmatpush.msra.mxu0 %v74
    %249 = vmatpush.msra.mxu0 %v73
    %250 = vmatpush.msra.mxu0 %v72
    %251 = vmatpush.msra.mxu0 %v71
    %252 = vmatmul.f32.gmra.mxu0 %v163
    %v253 = vpop.f32.mrf.mxu0
    %v254 = vadd.f32 %v234, %v253
    %255 = vdwg.mxu0
    %256 = vmatpush.msra.mxu0 %v102
    %257 = vmatpush.msra.mxu0 %v101
    %258 = vmatpush.msra.mxu0 %v100
    %259 = vmatpush.msra.mxu0 %v99
    %260 = vmatpush.msra.mxu0 %v98
    %261 = vmatpush.msra.mxu0 %v97
    %262 = vmatpush.msra.mxu0 %v96
    %263 = vmatpush.msra.mxu0 %v95
    %264 = vmatpush.msra.mxu0 %v94
    %265 = vmatpush.msra.mxu0 %v93
    %266 = vmatpush.msra.mxu0 %v92
    %267 = vmatpush.msra.mxu0 %v91
    %268 = vmatpush.msra.mxu0 %v90
    %269 = vmatpush.msra.mxu0 %v89
    %270 = vmatpush.msra.mxu0 %v88
    %271 = vmatpush.msra.mxu0 %v87
    %272 = vmatmul.f32.gmra.mxu0 %v164
    %v273 = vpop.f32.mrf.mxu0
    %v274 = vadd.f32 %v254, %v273
    %275 = vdwg.mxu0
    %276 = vmatpush.msra.mxu0 %v118
    %277 = vmatpush.msra.mxu0 %v117
    %278 = vmatpush.msra.mxu0 %v116
    %279 = vmatpush.msra.mxu0 %v115
    %280 = vmatpush.msra.mxu0 %v114
    %281 = vmatpush.msra.mxu0 %v113
    %282 = vmatpush.msra.mxu0 %v112
    %283 = vmatpush.msra.mxu0 %v111
    %284 = vmatpush.msra.mxu0 %v110
    %285 = vmatpush.msra.mxu0 %v109
    %286 = vmatpush.msra.mxu0 %v108
    %287 = vmatpush.msra.mxu0 %v107
    %288 = vmatpush.msra.mxu0 %v106
    %289 = vmatpush.msra.mxu0 %v105
    %290 = vmatpush.msra.mxu0 %v104
    %291 = vmatpush.msra.mxu0 %v103
    %292 = vmatmul.f32.gmra.mxu0 %v165
    %v293 = vpop.f32.mrf.mxu0
    %v294 = vadd.f32 %v274, %v293
    %295 = vdwg.mxu0
    %296 = vmatpush.msra.mxu0 %v134
    %297 = vmatpush.msra.mxu0 %v133
    %298 = vmatpush.msra.mxu0 %v132
    %299 = vmatpush.msra.mxu0 %v131
    %300 = vmatpush.msra.mxu0 %v130
    %301 = vmatpush.msra.mxu0 %v129
    %302 = vmatpush.msra.mxu0 %v128
    %303 = vmatpush.msra.mxu0 %v127
    %304 = vmatpush.msra.mxu0 %v126
    %305 = vmatpush.msra.mxu0 %v125
    %306 = vmatpush.msra.mxu0 %v124
    %307 = vmatpush.msra.mxu0 %v123
    %308 = vmatpush.msra.mxu0 %v122
    %309 = vmatpush.msra.mxu0 %v121
    %310 = vmatpush.msra.mxu0 %v120
    %311 = vmatpush.msra.mxu0 %v119
    %312 = vmatmul.f32.gmra.mxu0 %v166
    %v313 = vpop.f32.mrf.mxu0
    %v314 = vadd.f32 %v294, %v313
    %315 = vdwg.mxu0
    %316 = vmatpush.msra.mxu0 %v150
    %317 = vmatpush.msra.mxu0 %v149
    %318 = vmatpush.msra.mxu0 %v148
    %319 = vmatpush.msra.mxu0 %v147
    %320 = vmatpush.msra.mxu0 %v146
    %321 = vmatpush.msra.mxu0 %v145
    %322 = vmatpush.msra.mxu0 %v144
    %323 = vmatpush.msra.mxu0 %v143
    %324 = vmatpush.msra.mxu0 %v142
    %325 = vmatpush.msra.mxu0 %v141
    %326 = vmatpush.msra.mxu0 %v140
    %327 = vmatpush.msra.mxu0 %v139
    %328 = vmatpush.msra.mxu0 %v138
    %329 = vmatpush.msra.mxu0 %v137
    %330 = vmatpush.msra.mxu0 %v136
    %331 = vmatpush.msra.mxu0 %v135
    %332 = vmatmul.f32.gmra.mxu0 %v167
    %v333 = vpop.f32.mrf.mxu0
    %v334 = vadd.f32 %v314, %v333
    %335 = vdwg.mxu0
    %v336 = vmax.f32 %v334, 0.0
    %v337 = vld [vmem:[%s3] sm:$0xff]
    %v338 = vld [vmem:[%s3 + $0x8] sm:$0xff]
    %v339 = vld [vmem:[%s3 + $0x10] sm:$0xff]
    %v340 = vld [vmem:[%s3 + $0x18] sm:$0xff]
    %v341 = vld [vmem:[%s4] sm:$0x1]
    %v343 = vperm.slane %v341, 0
    %vm345 = vcmask 261120
    %v347 = vsel %vm345, %v336, 0
    %349 = vmatpush.msra.mxu0 0.0
    %350 = vmatpush.msra.mxu0 0.0
    %351 = vmatpush.msra.mxu0 0.0
    %352 = vmatpush.msra.mxu0 0.0
    %353 = vmatpush.msra.mxu0 0.0
    %354 = vmatpush.msra.mxu0 0.0
    %355 = vmatpush.msra.mxu0 0.0
    %356 = vmatpush.msra.mxu0 0.0
    %357 = vmatpush.msra.mxu0 0.0
    %358 = vmatpush.msra.mxu0 0.0
    %359 = vmatpush.msra.mxu0 0.0
    %360 = vmatpush.msra.mxu0 0.0
    %361 = vmatpush.msra.mxu0 %v340
    %362 = vmatpush.msra.mxu0 %v339
    %363 = vmatpush.msra.mxu0 %v338
    %364 = vmatpush.msra.mxu0 %v337
    %365 = vmatmul.f32.gmra.mxu0 %v347
    %v366 = vpop.f32.mrf.mxu0
    %v367 = vadd.f32 %v343, %v366
    %368 = vdwg.mxu0
    %vm369 = vcmask 58368
    %370 = vst.msk [vmem:[#allocation2] sm:$0x3] %vm369, %v367
    // Predicated region
    $region22: #{tpu_custom_call.1} parent=1 // pred_check
      _
    $region23: #{tpu_custom_call.1} parent=1 // pred_check_branch
      %372 = sbr.rel (0) target = $region25
    $region24: #{tpu_custom_call.1} parent=1 // pred_region
      %374 = vsyncadd [#allocation3], 0
      %s376 = sshll.u32 [#allocation2], 4
      %s377 = int_to_ptr.vmem [resolvable:$true] %s376
      %s378 = sshll.u32 %s5, 4
      %s379 = int_to_ptr.hbm [resolvable:$true] %s378
      %381 = dma.vmem_to_hbm [thread:$0]  %s377, 32, %s379, [#allocation3]
    $region25: #{tpu_custom_call.1} parent=1 // pred_fallthru
      _
    // Predicated region
    $region26: #{tpu_custom_call.1} parent=1 // pred_check
      _
    $region27: #{tpu_custom_call.1} parent=1 // pred_check_branch
      %383 = sbr.rel (0) target = $region29
    $region28: #{tpu_custom_call.1} parent=1 // pred_region
      %385 = dma.done [#allocation3], 32
    $region29: #{tpu_custom_call.1} parent=1 // pred_fallthru
      _
    %386 = vsyncpa [#allocation3], 1

</llo_original>
